<compile_context>
chip_gen: v7x
topology: tpu7x:2x2x1
jax: 0.10.0
libtpu: 0.0.40
codegen_flags: <defaults>
</compile_context>

<pallas_src>
import jax
import jax.numpy as jnp
from jax import lax
from jax.experimental import pallas as pl
from jax.experimental.pallas import tpu as pltpu

PAD = 0  # padding_idx for the embedding


def _pick_tile(n, candidates):
    for c in candidates:
        if n % c == 0:
            return c
    return n  # fall back to full dim (always legal as a block size)


# ----------------------------------------------------------------------------
# Kernel 1: tiled matmul + bias (out = x @ w + b).
# Used for the hoisted input projection and the hoisted tied-weight classifier.
# ----------------------------------------------------------------------------
def _matmul_bias_kernel(x_ref, w_ref, b_ref, o_ref):
    o_ref[...] = (jnp.dot(x_ref[...], w_ref[...],
                          preferred_element_type=jnp.float32)
                  + b_ref[...]).astype(o_ref.dtype)


def matmul_bias(x, w, b):
    """x: (M, K), w: (K, N), b: (1, N) -> (M, N) float32."""
    M, K = x.shape
    K2, N = w.shape
    assert K == K2
    tm = _pick_tile(M, (256, 128, 64, 32, 16, 8))
    tn = _pick_tile(N, (512, 256, 128))
    grid = (M // tm, N // tn)
    return pl.pallas_call(
        _matmul_bias_kernel,
        out_shape=jax.ShapeDtypeStruct((M, N), jnp.float32),
        grid_spec=pltpu.PrefetchScalarGridSpec(
            num_scalar_prefetch=0,
            grid=grid,
            in_specs=[
                pl.BlockSpec((tm, K), lambda i, j: (i, 0)),
                pl.BlockSpec((K, tn), lambda i, j: (0, j)),
                pl.BlockSpec((1, tn), lambda i, j: (0, j)),
            ],
            out_specs=pl.BlockSpec((tm, tn), lambda i, j: (i, j)),
        ),
        compiler_params=pltpu.CompilerParams(
            dimension_semantics=("parallel", "parallel"),
            vmem_limit_bytes=32 * 1024 * 1024,
        ),
    )(x, w, b)


# ----------------------------------------------------------------------------
# Kernel 2: serial LSTM recurrence. One grid step == TT time steps (unrolled).
# Inputs: precomputed input-projection gates (TT, Bp, 4H) per block, h0/c0,
# W_hh^T. Outputs: all hidden states (TT, Bp, H) per block + final (h, c).
# ----------------------------------------------------------------------------
def _lstm_kernel(gx_ref, h0_ref, c0_ref, whh_ref,
                 hs_ref, hT_ref, cT_ref,
                 h_sc, c_sc):
    tb = pl.program_id(0)

    @pl.when(tb == 0)
    def _():
        h_sc[...] = h0_ref[...]
        c_sc[...] = c0_ref[...]

    h = h_sc[...]                      # (Bp, H)
    c = c_sc[...]                      # (Bp, H)
    whh = whh_ref[...]                 # (H, 4H), loaded once per block
    H = h.shape[-1]
    TT = gx_ref.shape[0]

    def step(t, carry):
        h, c = carry
        # gates = (x @ W_ih^T + b) [precomputed] + h @ W_hh^T ; order i,f,g,o
        gates = gx_ref[t] + jnp.dot(h, whh, preferred_element_type=jnp.float32)
        i_g = jax.nn.sigmoid(gates[:, 0 * H:1 * H])
        f_g = jax.nn.sigmoid(gates[:, 1 * H:2 * H])
        g_g = jnp.tanh(gates[:, 2 * H:3 * H])
        o_g = jax.nn.sigmoid(gates[:, 3 * H:4 * H])
        c_new = f_g * c + i_g * g_g
        h_new = o_g * jnp.tanh(c_new)
        hs_ref[t] = h_new
        return (h_new, c_new)

    h, c = lax.fori_loop(0, TT, step, (h, c), unroll=True)

    h_sc[...] = h
    c_sc[...] = c

    # only write the final state once (dead stores otherwise)
    @pl.when(tb == pl.num_programs(0) - 1)
    def _():
        hT_ref[...] = h
        cT_ref[...] = c


# ----------------------------------------------------------------------------
# Wrapper: full forward pass of RecurrentDecoder.
# ----------------------------------------------------------------------------
def recurrent_decoder_forward(token_ids, hidden, params, *, time_block=8):
    """
    token_ids : (T, B) int32
    hidden    : (h0, c0), each (1, B, H) float32   (num_layers = 1)
    returns   : logits (T, B, V), (hT, cT) each (1, B, H)
    """
    emb_w = params["emb_weight"]          # (V, H) -- also classifier weight (tied)
    w_ih, w_hh = params["w_ih"], params["w_hh"]          # (4H, H)
    b_ih, b_hh, b_cls = params["b_ih"], params["b_hh"], params["b_cls"]

    T, B = token_ids.shape
    V, H = emb_w.shape

    # pad batch up to a sublane multiple (>= 8) -> no masked partial stores
    Bp = max(8, ((B + 7) // 8) * 8)

    # Embedding lookup (gather) is glue; done in plain JAX.
    # TODO(synk): packed-sequence (variable lengths) path of the module is not implemented.
    emb = jnp.take(emb_w, token_ids, axis=0)             # (T, B, H)
    emb = jnp.pad(emb, ((0, 0), (0, Bp - B), (0, 0)))    # (T, Bp, H)

    h0 = jnp.pad(hidden[0][0], ((0, Bp - B), (0, 0)))    # (Bp, H)
    c0 = jnp.pad(hidden[1][0], ((0, Bp - B), (0, 0)))    # (Bp, H)

    # ---- hoisted input projection: one big matmul over all time steps ------
    b_gate = (b_ih + b_hh).reshape(1, 4 * H)
    gx = matmul_bias(emb.reshape(T * Bp, H), jnp.transpose(w_ih), b_gate)
    gx = gx.reshape(T, Bp, 4 * H)

    # ---- serial recurrence, TT time steps per grid iteration ---------------
    tt = _pick_tile(T, (time_block, 8, 4, 2, 1))
    grid = (T // tt,)

    hs, h_t, c_t = pl.pallas_call(
        _lstm_kernel,
        out_shape=(
            jax.ShapeDtypeStruct((T, Bp, H), jnp.float32),   # all hidden states
            jax.ShapeDtypeStruct((Bp, H), jnp.float32),      # final h
            jax.ShapeDtypeStruct((Bp, H), jnp.float32),      # final c
        ),
        grid_spec=pltpu.PrefetchScalarGridSpec(
            num_scalar_prefetch=0,
            grid=grid,
            in_specs=[
                pl.BlockSpec((tt, Bp, 4 * H), lambda i: (i, 0, 0)),  # gates_x
                pl.BlockSpec((Bp, H), lambda i: (0, 0)),             # h0
                pl.BlockSpec((Bp, H), lambda i: (0, 0)),             # c0
                pl.BlockSpec((H, 4 * H), lambda i: (0, 0)),          # W_hh^T
            ],
            out_specs=[
                pl.BlockSpec((tt, Bp, H), lambda i: (i, 0, 0)),      # h states
                pl.BlockSpec((Bp, H), lambda i: (0, 0)),             # h_T
                pl.BlockSpec((Bp, H), lambda i: (0, 0)),             # c_T
            ],
            scratch_shapes=[
                pltpu.VMEM((Bp, H), jnp.float32),                    # h carry
                pltpu.VMEM((Bp, H), jnp.float32),                    # c carry
            ],
        ),
        compiler_params=pltpu.CompilerParams(
            dimension_semantics=("arbitrary",),   # sequential recurrence
            vmem_limit_bytes=32 * 1024 * 1024,
        ),
    )(gx, h0, c0, jnp.transpose(w_hh))

    # ---- hoisted tied-weight classifier: one big tiled matmul --------------
    logits = matmul_bias(hs.reshape(T * Bp, H), jnp.transpose(emb_w),
                         b_cls.reshape(1, V))
    logits = logits.reshape(T, Bp, V)[:, :B, :]

    h_t = h_t[:B]
    c_t = c_t[:B]
    return logits, (h_t[None, :, :], c_t[None, :, :])


# ----------------------------------------------------------------------------
# Pure-JAX reference (same math) for correctness checking.
# ----------------------------------------------------------------------------
def reference_forward(token_ids, hidden, params):
    emb_w = params["emb_weight"]
    w_ih, w_hh = params["w_ih"], params["w_hh"]
    b_ih, b_hh, b_cls = params["b_ih"], params["b_hh"], params["b_cls"]
    H = emb_w.shape[1]
    emb = jnp.take(emb_w, token_ids, axis=0)      # (T, B, H)
    h, c = hidden[0][0], hidden[1][0]

    def step(carry, x_t):
        h, c = carry
        gates = x_t @ w_ih.T + b_ih + h @ w_hh.T + b_hh
        i = jax.nn.sigmoid(gates[:, :H])
        f = jax.nn.sigmoid(gates[:, H:2 * H])
        g = jnp.tanh(gates[:, 2 * H:3 * H])
        o = jax.nn.sigmoid(gates[:, 3 * H:])
        c = f * c + i * g
        h = o * jnp.tanh(c)
        return (h, c), h

    (h, c), hs = jax.lax.scan(step, (h, c), emb)
    logits = hs @ emb_w.T + b_cls
    return logits, (h[None], c[None])


# ----------------------------------------------------------------------------
# Deterministic parameter init (shapes per the nn.Module __init__).
# ----------------------------------------------------------------------------
def init_params(key, vocab_size, hidden_size):
    k = jax.random.split(key, 6)
    scale = 1.0 / jnp.sqrt(hidden_size)
    emb_w = jax.random.normal(k[0], (vocab_size, hidden_size), jnp.float32) * 0.1
    emb_w = emb_w.at[PAD].set(0.0)  # padding_idx row zeroed (nn.Embedding padding_idx)
    return {
        "emb_weight": emb_w,  # tie_embedding=True -> classifier.weight is this
        "w_ih": jax.random.uniform(k[1], (4 * hidden_size, hidden_size),
                                   jnp.float32, -scale, scale),
        "w_hh": jax.random.uniform(k[2], (4 * hidden_size, hidden_size),
                                   jnp.float32, -scale, scale),
        "b_ih": jax.random.uniform(k[3], (4 * hidden_size,),
                                   jnp.float32, -scale, scale),
        "b_hh": jax.random.uniform(k[4], (4 * hidden_size,),
                                   jnp.float32, -scale, scale),
        "b_cls": jax.random.uniform(k[5], (vocab_size,),
                                    jnp.float32, -scale, scale),
    }


if __name__ == "__main__":
    T, B, H, V = 16, 2, 32, 64
    key = jax.random.PRNGKey(0)
    kp, kt, kh, kc = jax.random.split(key, 4)

    params = init_params(kp, V, H)
    token_ids = jax.random.randint(kt, (T, B), 1, V, dtype=jnp.int32)  # avoid PAD
    h0 = jax.random.normal(kh, (1, B, H), jnp.float32) * 0.1
    c0 = jax.random.normal(kc, (1, B, H), jnp.float32) * 0.1

    logits, (h_t, c_t) = recurrent_decoder_forward(token_ids, (h0, c0), params)
    jax.block_until_ready(logits)
    jax.block_until_ready(h_t)
    jax.block_until_ready(c_t)

    ref_logits, (ref_h, ref_c) = reference_forward(token_ids, (h0, c0), params)
    assert logits.shape == (T, B, V) and h_t.shape == (1, B, H)
    assert jnp.allclose(logits, ref_logits, atol=1e-3, rtol=1e-3)
    assert jnp.allclose(h_t, ref_h, atol=1e-3, rtol=1e-3)
    assert jnp.allclose(c_t, ref_c, atol=1e-3, rtol=1e-3)

    print("KERNEL_OK")
</pallas_src>

<mosaic_0001>
module attributes {stable_mosaic.version = 11 : i64} {
  func.func @_matmul_bias_kernel(%arg0: i32, %arg1: i32, %arg2: memref<128x32xf32, #tpu.memory_space<vmem>>, %arg3: memref<32x128xf32, #tpu.memory_space<vmem>>, %arg4: memref<1x128xf32, #tpu.memory_space<vmem>>, %arg5: memref<128x128xf32, #tpu.memory_space<vmem>>) attributes {dimension_semantics = [#tpu.dimension_semantics<parallel>, #tpu.dimension_semantics<parallel>], iteration_bounds = array<i64: 1, 1>, scalar_prefetch = 0 : i64, scratch_operands = 0 : i64, tpu.core_type = #tpu.core_type<tc>, window_params = [{transform_indices = @transform_0, window_bounds = array<i64: 128, 32>}, {transform_indices = @transform_1, window_bounds = array<i64: 32, 128>}, {transform_indices = @transform_2, window_bounds = array<i64: 1, 128>}, {transform_indices = @transform_3, window_bounds = array<i64: 128, 128>}]} {
    %c0 = arith.constant 0 : index
    %c0_0 = arith.constant 0 : index
    %0 = vector.load %arg2[%c0, %c0_0] : memref<128x32xf32, #tpu.memory_space<vmem>>, vector<128x32xf32>
    %c0_1 = arith.constant 0 : index
    %c0_2 = arith.constant 0 : index
    %1 = vector.load %arg3[%c0_1, %c0_2] : memref<32x128xf32, #tpu.memory_space<vmem>>, vector<32x128xf32>
    %cst = arith.constant dense<0.000000e+00> : vector<128x128xf32>
    %2 = tpu.matmul %0, %1, %cst {dimension_numbers = #tpu.dot_dimension_numbers<[1], [0], [0], [1], [0, 0, 1, 1], [], []>} : vector<128x32xf32>, vector<32x128xf32>, vector<128x128xf32> -> vector<128x128xf32>
    %c0_3 = arith.constant 0 : index
    %c0_4 = arith.constant 0 : index
    %3 = vector.load %arg4[%c0_3, %c0_4] : memref<1x128xf32, #tpu.memory_space<vmem>>, vector<1x128xf32>
    %4 = vector.broadcast %3 : vector<1x128xf32> to vector<128x128xf32>
    %5 = arith.addf %2, %4 : vector<128x128xf32>
    %c0_5 = arith.constant 0 : index
    %c0_6 = arith.constant 0 : index
    %6 = vector.load %arg5[%c0_5, %c0_6] : memref<128x128xf32, #tpu.memory_space<vmem>>, vector<128x128xf32>
    tpu.vector_store %arg5[%c0_5, %c0_6], %5 {strides = array<i32>} : memref<128x128xf32, #tpu.memory_space<vmem>>, vector<128x128xf32>,
    return
  }
  func.func @transform_0(%arg0: i32, %arg1: i32) -> (i32, i32) {
    %c0_i32 = arith.constant 0 : i32
    %c0_i32_0 = arith.constant 0 : i32
    return %arg0, %c0_i32 : i32, i32
  }
  func.func @transform_1(%arg0: i32, %arg1: i32) -> (i32, i32) {
    %c0_i32 = arith.constant 0 : i32
    %c0_i32_0 = arith.constant 0 : i32
    return %c0_i32, %arg1 : i32, i32
  }
  func.func @transform_2(%arg0: i32, %arg1: i32) -> (i32, i32) {
    %c0_i32 = arith.constant 0 : i32
    %c0_i32_0 = arith.constant 0 : i32
    return %c0_i32, %arg1 : i32, i32
  }
  func.func @transform_3(%arg0: i32, %arg1: i32) -> (i32, i32) {
    %c0_i32 = arith.constant 0 : i32
    return %arg0, %arg1 : i32, i32
  }
}

</mosaic_0001>

<llo_original>
// kernel: tpu_custom_call.1
$region0: #{tpu_custom_call.1}
  #allocation0 [shape = 'u32[]', space=smem, size = 0x4, offset = 0x4, fixed_abs, tag = 'smem constant byte address 0x4 - core index']
  #allocation1 [shape = 'u32[144,128]{1,0:T(1,128)}', space=vmem, size = 0x12000, scoped, tag = 'internal scratch']
  %s0 = inlined_call_operand.vmem [shape: f32[128,32], index: 0, kind: input, shape index: {}]
  %s1 = inlined_call_operand.vmem [shape: f32[32,128], index: 1, kind: input, shape index: {}]
  %s2 = inlined_call_operand.vmem [shape: f32[1,128], index: 2, kind: input, shape index: {}]
  %s3 = inlined_call_operand.hbm [shape: f32[128,128], index: 3, kind: output, shape index: {}]
  %s4 = sld [smem:[#allocation0]]
  $region22: #{tpu_custom_call.1} parent=0
    _
  %s6 = ssub.s32 1, %s4
  %s7 = scalar_select 0, %s6, %s4
  $region1: #{tpu_custom_call.1} parent=0
    #allocation2 [shape = 'u8[65536]{0}', space=vmem, size = 0x10000, scoped, tag = 'output window, operand 0, single buffered']
    #allocation3 [shape = 's32[1]{0}', space=sflag, size = 0x4, scoped, tag = 'scoped memory for tpu_custom_call.1']
    %8 = vsyncpa [#allocation3], 0
    // Predicated region
    $region2: #{tpu_custom_call.1} parent=1 // pred_check
      _
    $region3: #{tpu_custom_call.1} parent=1 // pred_check_branch
      %10 = sbr.rel (0) target = $region5
    $region4: #{tpu_custom_call.1} parent=1 // pred_region
      _
    $region5: #{tpu_custom_call.1} parent=1 // pred_fallthru
      _
    // Predicated region
    $region6: #{tpu_custom_call.1} parent=1 // pred_check
      _
    $region7: #{tpu_custom_call.1} parent=1 // pred_check_branch
      %12 = sbr.rel (0) target = $region9
    $region8: #{tpu_custom_call.1} parent=1 // pred_region
      _
    $region9: #{tpu_custom_call.1} parent=1 // pred_fallthru
      _
    // Predicated region
    $region10: #{tpu_custom_call.1} parent=1 // pred_check
      _
    $region11: #{tpu_custom_call.1} parent=1 // pred_check_branch
      %14 = sbr.rel (0) target = $region13
    $region12: #{tpu_custom_call.1} parent=1 // pred_region
      _
    $region13: #{tpu_custom_call.1} parent=1 // pred_fallthru
      _
    %v15 = vld [vmem:[%s0] sm:$0xff]
    %v16 = vld [vmem:[%s0 + $0x8] sm:$0xff]
    %v17 = vld [vmem:[%s0 + $0x10] sm:$0xff]
    %v18 = vld [vmem:[%s0 + $0x18] sm:$0xff]
    %v19 = vld [vmem:[%s0 + $0x20] sm:$0xff]
    %v20 = vld [vmem:[%s0 + $0x28] sm:$0xff]
    %v21 = vld [vmem:[%s0 + $0x30] sm:$0xff]
    %v22 = vld [vmem:[%s0 + $0x38] sm:$0xff]
    %v23 = vld [vmem:[%s0 + $0x40] sm:$0xff]
    %v24 = vld [vmem:[%s0 + $0x48] sm:$0xff]
    %v25 = vld [vmem:[%s0 + $0x50] sm:$0xff]
    %v26 = vld [vmem:[%s0 + $0x58] sm:$0xff]
    %v27 = vld [vmem:[%s0 + $0x60] sm:$0xff]
    %v28 = vld [vmem:[%s0 + $0x68] sm:$0xff]
    %v29 = vld [vmem:[%s0 + $0x70] sm:$0xff]
    %v30 = vld [vmem:[%s0 + $0x78] sm:$0xff]
    %v31 = vld [vmem:[%s1] sm:$0xff]
    %v32 = vld [vmem:[%s1 + $0x8] sm:$0xff]
    %v33 = vld [vmem:[%s1 + $0x10] sm:$0xff]
    %v34 = vld [vmem:[%s1 + $0x18] sm:$0xff]
    %v35 = vld [vmem:[%s2] sm:$0x1]
    %v37 = vlaneseq
    %v38 = vshrl.u32 %v37, 7
    %v39 = vsub.s32 0, %v38
    %v40 = vrot.slane %v35, %v39
    %vm42 = vcmask 261120
    %v44 = vsel %vm42, %v15, 0
    %v47 = vsel %vm42, %v16, 0
    %v50 = vsel %vm42, %v17, 0
    %v53 = vsel %vm42, %v18, 0
    %v56 = vsel %vm42, %v19, 0
    %v59 = vsel %vm42, %v20, 0
    %v62 = vsel %vm42, %v21, 0
    %v65 = vsel %vm42, %v22, 0
    %v68 = vsel %vm42, %v23, 0
    %v71 = vsel %vm42, %v24, 0
    %v74 = vsel %vm42, %v25, 0
    %v77 = vsel %vm42, %v26, 0
    %v80 = vsel %vm42, %v27, 0
    %v83 = vsel %vm42, %v28, 0
    %v86 = vsel %vm42, %v29, 0
    %v89 = vsel %vm42, %v30, 0
    %91 = vmatprep.subr.mxu0 0.0
    %92 = vmatpush1.msra.mxu0 %v31
    %93 = vmatprep.subr.mxu0 0.0
    %94 = vmatpush1.msra.mxu0 %v32
    %95 = vmatprep.subr.mxu0 0.0
    %96 = vmatpush1.msra.mxu0 %v33
    %97 = vmatprep.subr.mxu0 0.0
    %98 = vmatpush1.msra.mxu0 %v34
    %99 = vmatprep.subr.mxu0 0.0
    %100 = vmatpush1.msra.mxu0 0.0
    %101 = vmatprep.subr.mxu0 0.0
    %102 = vmatpush1.msra.mxu0 0.0
    %103 = vmatprep.subr.mxu0 0.0
    %104 = vmatpush1.msra.mxu0 0.0
    %105 = vmatprep.subr.mxu0 0.0
    %106 = vmatpush1.msra.mxu0 0.0
    %107 = vmatprep.subr.mxu0 0.0
    %108 = vmatpush1.msra.mxu0 0.0
    %109 = vmatprep.subr.mxu0 0.0
    %110 = vmatpush1.msra.mxu0 0.0
    %111 = vmatprep.subr.mxu0 0.0
    %112 = vmatpush1.msra.mxu0 0.0
    %113 = vmatprep.subr.mxu0 0.0
    %114 = vmatpush1.msra.mxu0 0.0
    %115 = vmatprep.subr.mxu0 0.0
    %116 = vmatpush1.msra.mxu0 0.0
    %117 = vmatprep.subr.mxu0 0.0
    %118 = vmatpush1.msra.mxu0 0.0
    %119 = vmatprep.subr.mxu0 0.0
    %120 = vmatpush1.msra.mxu0 0.0
    %121 = vmatprep.subr.mxu0 0.0
    %122 = vmatpush1.msra.mxu0 0.0
    %123 = vmatprep.subr.mxu0 0.0
    %124 = vmatpush1.msra.mxu0 0.0
    %125 = vmatprep.subr.mxu0 0.0
    %126 = vmatpush1.msra.mxu0 0.0
    %127 = vmatprep.subr.mxu0 0.0
    %128 = vmatpush1.msra.mxu0 0.0
    %129 = vmatprep.subr.mxu0 0.0
    %130 = vmatpush1.msra.mxu0 0.0
    %131 = vmatprep.subr.mxu0 0.0
    %132 = vmatpush1.msra.mxu0 0.0
    %133 = vmatprep.subr.mxu0 0.0
    %134 = vmatpush1.msra.mxu0 0.0
    %135 = vmatprep.subr.mxu0 0.0
    %136 = vmatpush1.msra.mxu0 0.0
    %137 = vmatprep.subr.mxu0 0.0
    %138 = vmatpush1.msra.mxu0 0.0
    %139 = vmatprep.subr.mxu0 0.0
    %140 = vmatpush1.msra.mxu0 0.0
    %141 = vmatprep.subr.mxu0 0.0
    %142 = vmatpush1.msra.mxu0 0.0
    %143 = vmatprep.subr.mxu0 0.0
    %144 = vmatpush1.msra.mxu0 0.0
    %145 = vmatprep.subr.mxu0 0.0
    %146 = vmatpush1.msra.mxu0 0.0
    %147 = vmatprep.subr.mxu0 0.0
    %148 = vmatpush1.msra.mxu0 0.0
    %149 = vmatprep.subr.mxu0 0.0
    %150 = vmatpush1.msra.mxu0 0.0
    %151 = vmatprep.subr.mxu0 0.0
    %152 = vmatpush1.msra.mxu0 0.0
    %153 = vmatprep.subr.mxu0 0.0
    %154 = vmatpush1.msra.mxu0 0.0
    %155 = vmatprep.mubr.f32.mxu0 0.0
    %156 = vmatmul.mubr.f32.gmra.mrb[0].mxu0 %v44
    %v157 = vpop.f32.mrb[0].mxu0
    %v158 = vadd.f32 %v40, %v157
    %v159 = vpop.f32.mrb[0].mxu0
    %160 = vmatprep.mubr.f32.mxu0 0.0
    %161 = vmatmul.mubr.f32.gmra.mrb[0].mxu0 %v47
    %v162 = vpop.f32.mrb[0].mxu0
    %v163 = vadd.f32 %v40, %v162
    %v164 = vpop.f32.mrb[0].mxu0
    %165 = vmatprep.mubr.f32.mxu0 0.0
    %166 = vmatmul.mubr.f32.gmra.mrb[0].mxu0 %v50
    %v167 = vpop.f32.mrb[0].mxu0
    %v168 = vadd.f32 %v40, %v167
    %v169 = vpop.f32.mrb[0].mxu0
    %170 = vmatprep.mubr.f32.mxu0 0.0
    %171 = vmatmul.mubr.f32.gmra.mrb[0].mxu0 %v53
    %v172 = vpop.f32.mrb[0].mxu0
    %v173 = vadd.f32 %v40, %v172
    %v174 = vpop.f32.mrb[0].mxu0
    %175 = vmatprep.mubr.f32.mxu0 0.0
    %176 = vmatmul.mubr.f32.gmra.mrb[0].mxu0 %v56
    %v177 = vpop.f32.mrb[0].mxu0
    %v178 = vadd.f32 %v40, %v177
    %v179 = vpop.f32.mrb[0].mxu0
    %180 = vmatprep.mubr.f32.mxu0 0.0
    %181 = vmatmul.mubr.f32.gmra.mrb[0].mxu0 %v59
    %v182 = vpop.f32.mrb[0].mxu0
    %v183 = vadd.f32 %v40, %v182
    %v184 = vpop.f32.mrb[0].mxu0
    %185 = vmatprep.mubr.f32.mxu0 0.0
    %186 = vmatmul.mubr.f32.gmra.mrb[0].mxu0 %v62
    %v187 = vpop.f32.mrb[0].mxu0
    %v188 = vadd.f32 %v40, %v187
    %v189 = vpop.f32.mrb[0].mxu0
    %190 = vmatprep.mubr.f32.mxu0 0.0
    %191 = vmatmul.mubr.f32.gmra.mrb[0].mxu0 %v65
    %v192 = vpop.f32.mrb[0].mxu0
    %v193 = vadd.f32 %v40, %v192
    %v194 = vpop.f32.mrb[0].mxu0
    %195 = vmatprep.mubr.f32.mxu0 0.0
    %196 = vmatmul.mubr.f32.gmra.mrb[0].mxu0 %v68
    %v197 = vpop.f32.mrb[0].mxu0
    %v198 = vadd.f32 %v40, %v197
    %v199 = vpop.f32.mrb[0].mxu0
    %200 = vmatprep.mubr.f32.mxu0 0.0
    %201 = vmatmul.mubr.f32.gmra.mrb[0].mxu0 %v71
    %v202 = vpop.f32.mrb[0].mxu0
    %v203 = vadd.f32 %v40, %v202
    %v204 = vpop.f32.mrb[0].mxu0
    %205 = vmatprep.mubr.f32.mxu0 0.0
    %206 = vmatmul.mubr.f32.gmra.mrb[0].mxu0 %v74
    %v207 = vpop.f32.mrb[0].mxu0
    %v208 = vadd.f32 %v40, %v207
    %v209 = vpop.f32.mrb[0].mxu0
    %210 = vmatprep.mubr.f32.mxu0 0.0
    %211 = vmatmul.mubr.f32.gmra.mrb[0].mxu0 %v77
    %v212 = vpop.f32.mrb[0].mxu0
    %v213 = vadd.f32 %v40, %v212
    %v214 = vpop.f32.mrb[0].mxu0
    %215 = vmatprep.mubr.f32.mxu0 0.0
    %216 = vmatmul.mubr.f32.gmra.mrb[0].mxu0 %v80
    %v217 = vpop.f32.mrb[0].mxu0
    %v218 = vadd.f32 %v40, %v217
    %v219 = vpop.f32.mrb[0].mxu0
    %220 = vmatprep.mubr.f32.mxu0 0.0
    %221 = vmatmul.mubr.f32.gmra.mrb[0].mxu0 %v83
    %v222 = vpop.f32.mrb[0].mxu0
    %v223 = vadd.f32 %v40, %v222
    %v224 = vpop.f32.mrb[0].mxu0
    %225 = vmatprep.mubr.f32.mxu0 0.0
    %226 = vmatmul.mubr.f32.gmra.mrb[0].mxu0 %v86
    %v227 = vpop.f32.mrb[0].mxu0
    %v228 = vadd.f32 %v40, %v227
    %v229 = vpop.f32.mrb[0].mxu0
    %230 = vmatprep.mubr.f32.mxu0 0.0
    %231 = vmatmul.mubr.f32.gmra.mrb[0].mxu0 %v89
    %v232 = vpop.f32.mrb[0].mxu0
    %v233 = vadd.f32 %v40, %v232
    %v234 = vpop.f32.mrb[0].mxu0
    %235 = vdwg.mxu0
    %236 = vst [vmem:[#allocation2] sm:$0xff] %v158
    %237 = vst [vmem:[#allocation2 + $0x8] sm:$0xff] %v163
    %238 = vst [vmem:[#allocation2 + $0x10] sm:$0xff] %v168
    %239 = vst [vmem:[#allocation2 + $0x18] sm:$0xff] %v173
    %240 = vst [vmem:[#allocation2 + $0x20] sm:$0xff] %v178
    %241 = vst [vmem:[#allocation2 + $0x28] sm:$0xff] %v183
    %242 = vst [vmem:[#allocation2 + $0x30] sm:$0xff] %v188
    %243 = vst [vmem:[#allocation2 + $0x38] sm:$0xff] %v193
    %244 = vst [vmem:[#allocation2 + $0x40] sm:$0xff] %v198
    %245 = vst [vmem:[#allocation2 + $0x48] sm:$0xff] %v203
    %246 = vst [vmem:[#allocation2 + $0x50] sm:$0xff] %v208
    %247 = vst [vmem:[#allocation2 + $0x58] sm:$0xff] %v213
    %248 = vst [vmem:[#allocation2 + $0x60] sm:$0xff] %v218
    %249 = vst [vmem:[#allocation2 + $0x68] sm:$0xff] %v223
    %250 = vst [vmem:[#allocation2 + $0x70] sm:$0xff] %v228
    %251 = vst [vmem:[#allocation2 + $0x78] sm:$0xff] %v233
    // Predicated region
    $region14: #{tpu_custom_call.1} parent=1 // pred_check
      _
    $region15: #{tpu_custom_call.1} parent=1 // pred_check_branch
      %253 = sbr.rel (0) target = $region17
    $region16: #{tpu_custom_call.1} parent=1 // pred_region
      %s255 = ssub.s32 2048, 2048
      %256 = vsyncadd [#allocation3], %s255
      %s257 = sshll.u32 [#allocation2], 4
      %s258 = int_to_ptr.vmem [resolvable:$true] %s257
      %263 = dma.vmem_to_hbm [thread:$0]  %s258, 2048, %s3, [#allocation3], 128, 128, 8
    $region17: #{tpu_custom_call.1} parent=1 // pred_fallthru
      _
    // Predicated region
    $region18: #{tpu_custom_call.1} parent=1 // pred_check
      _
    $region19: #{tpu_custom_call.1} parent=1 // pred_check_branch
      %265 = sbr.rel (0) target = $region21
    $region20: #{tpu_custom_call.1} parent=1 // pred_region
      %266 = dma.done [#allocation3], 2048
    $region21: #{tpu_custom_call.1} parent=1 // pred_fallthru
      _
    %267 = vsyncpa [#allocation3], 1

</llo_original>
